<compile_context>
chip_gen: v7x
topology: tpu7x:2x2x1
jax: 0.10.0
libtpu: 0.0.40
codegen_flags: <defaults>
</compile_context>

<pallas_src>
import functools

import jax
import jax.numpy as jnp
from jax.experimental import pallas as pl
from jax.experimental.pallas import tpu as pltpu


def _relumax_kernel(x_ref, o_ref, *, max_val):
    x = x_ref[...]
    zero = jnp.zeros((), dtype=x.dtype)
    cap = jnp.asarray(max_val, dtype=x.dtype)
    # relu then clamp at max_val  ==  min(max(x, 0), max_val)
    o_ref[...] = jnp.minimum(jnp.maximum(x, zero), cap)


def _choose_cols(total: int) -> int:
    """Widest 'nice' multiple of 128 dividing `total` (total is 128-aligned)."""
    for c in (2048, 1536, 1024, 768, 512, 384, 256, 128):
        if total % c == 0:
            return c
    return 128


def _sublane(dtype) -> int:
    """Native sublane packing: 8 for 4-byte, 16 for 2-byte, 32 for 1-byte dtypes."""
    return max(8, 32 // jnp.dtype(dtype).itemsize)


def _relumax_2d(x2d: jax.Array, max_val, *, inplace: bool) -> jax.Array:
    rows, cols = x2d.shape
    dtype = x2d.dtype
    itemsize = jnp.dtype(dtype).itemsize
    sub = _sublane(dtype)
    total_bytes = rows * cols * itemsize

    # ~4 MiB blocks; with double-buffered in+out that's ~16 MiB of VMEM,
    # comfortable on every generation including v7x (64 MiB total).
    target_block_bytes = 4 * 1024 * 1024
    max_block_rows = max(sub, (target_block_bytes // (cols * itemsize)) // sub * sub)

    if total_bytes <= (1 << 20) or rows <= 2 * sub:
        # Tiny input: single block == full array, no pipeline fill/drain.
        block_rows = rows
        grid = (1,)
    else:
        # Force >= 2 grid steps so v7x's two TensorCores both get work;
        # prefer an even step count so neither core idles on the last step.
        n_steps = max(2, pl.cdiv(rows, max_block_rows))
        if n_steps % 2:
            n_steps += 1
        block_rows = min(
            max_block_rows,
            ((pl.cdiv(rows, n_steps) + sub - 1) // sub) * sub,
        )
        grid = (pl.cdiv(rows, block_rows),)

    extra = {}
    if inplace:
        # Only profitable when the caller donates x (in-place activation update).
        extra["input_output_aliases"] = {0: 0}

    return pl.pallas_call(
        functools.partial(_relumax_kernel, max_val=max_val),
        out_shape=jax.ShapeDtypeStruct((rows, cols), dtype),
        grid=grid,
        in_specs=[pl.BlockSpec((block_rows, cols), lambda i: (i, 0))],
        out_specs=pl.BlockSpec((block_rows, cols), lambda i: (i, 0)),
        compiler_params=pltpu.CompilerParams(
            dimension_semantics=("parallel",),
            # v5e's 16 MiB scoped-VMEM default sits right at the double-buffer
            # footprint; 32 MiB is safe on all generations (v7x VMEM = 64 MiB).
            vmem_limit_bytes=32 * 1024 * 1024,
        ),
        cost_estimate=pl.CostEstimate(
            flops=2 * rows * cols,                    # one max + one min per element
            bytes_accessed=2 * rows * cols * itemsize,  # pure streaming read+write
            transcendentals=0,
        ),
        **extra,
    )(x2d)


def relumax(x: jax.Array, max_val, *, inplace: bool = False) -> jax.Array:
    """clamp(relu(x), max=max_val) elementwise via a Pallas TPU kernel.

    `max_val` must be a static Python scalar (as in the PyTorch module, where
    it is fixed at construction time); it is baked into the kernel.
    """
    orig_shape = x.shape
    dtype = x.dtype
    total = x.size
    lane = 128

    zero = jnp.zeros((), dtype=dtype)
    cap = jnp.asarray(max_val, dtype=dtype)

    if total == 0:
        return x
    if total < lane:
        # Smaller than one lane-width: plain jnp is already optimal.
        return jnp.minimum(jnp.maximum(x, zero), cap)

    x_flat = x.reshape(-1)            # contiguous -> metadata-only reshape
    main = (total // lane) * lane     # largest 128-aligned prefix
    tail = total - main

    if tail == 0:
        cols = _choose_cols(total)
        out2d = _relumax_2d(x_flat.reshape(total // cols, cols), max_val,
                            inplace=inplace)
        return out2d.reshape(orig_shape)

    # Aligned-prefix kernel + <128-element tail in plain jnp (no jnp.pad of
    # the whole array, no full-size post-slice).
    cols = _choose_cols(main)
    head_out = _relumax_2d(x_flat[:main].reshape(main // cols, cols), max_val,
                           inplace=False)
    tail_out = jnp.minimum(jnp.maximum(x_flat[main:], zero), cap)
    return jnp.concatenate([head_out.reshape(-1), tail_out]).reshape(orig_shape)


if __name__ == "__main__":
    max_val = 6.0  # e.g. ReLUMax(6) as used in PhiNet
    k_main, k_tail, k_big = jax.random.split(jax.random.PRNGKey(0), 3)

    # Primary check: NCHW conv-activation shape implied by the module.
    x = jax.random.normal(k_main, (2, 4, 16, 16), dtype=jnp.float32) * 10.0
    out = jax.block_until_ready(relumax(x, max_val))
    ref = jnp.minimum(jnp.maximum(x, 0.0), jnp.float32(max_val))
    assert out.shape == x.shape and out.dtype == x.dtype
    assert jnp.array_equal(out, ref)

    # Non-128-divisible element count -> aligned-prefix kernel + jnp tail.
    x_t = jax.random.normal(k_tail, (3, 5, 7, 11), dtype=jnp.float32) * 10.0
    out_t = jax.block_until_ready(relumax(x_t, max_val))
    ref_t = jnp.minimum(jnp.maximum(x_t, 0.0), jnp.float32(max_val))
    assert out_t.shape == x_t.shape and jnp.array_equal(out_t, ref_t)

    # >1 MiB input -> multi-block path (>=2 parallel steps, masked final block).
    x_b = jax.random.normal(k_big, (4, 64, 33, 32), dtype=jnp.float32) * 10.0
    out_b = jax.block_until_ready(relumax(x_b, max_val))
    ref_b = jnp.minimum(jnp.maximum(x_b, 0.0), jnp.float32(max_val))
    assert out_b.shape == x_b.shape and jnp.array_equal(out_b, ref_b)

    print("KERNEL_OK")
</pallas_src>

<mosaic_0001>
module attributes {stable_mosaic.version = 11 : i64} {
  func.func @_relumax_kernel(%arg0: i32, %arg1: memref<1x2048xf32, #tpu.memory_space<vmem>>, %arg2: memref<1x2048xf32, #tpu.memory_space<vmem>>) attributes {dimension_semantics = [#tpu.dimension_semantics<parallel>], iteration_bounds = array<i64: 1>, scalar_prefetch = 0 : i64, scratch_operands = 0 : i64, tpu.core_type = #tpu.core_type<tc>, window_params = [{transform_indices = @transform_0, window_bounds = array<i64: 1, 2048>}, {transform_indices = @transform_1, window_bounds = array<i64: 1, 2048>}]} {
    %c0 = arith.constant 0 : index
    %c0_0 = arith.constant 0 : index
    %0 = vector.load %arg1[%c0, %c0_0] : memref<1x2048xf32, #tpu.memory_space<vmem>>, vector<1x2048xf32>
    %cst = arith.constant 0.000000e+00 : f32
    %1 = vector.broadcast %cst : f32 to vector<1x2048xf32>
    %2 = arith.maximumf %0, %1 : vector<1x2048xf32>
    %cst_1 = arith.constant 6.000000e+00 : f32
    %3 = vector.broadcast %cst_1 : f32 to vector<1x2048xf32>
    %4 = arith.minimumf %2, %3 : vector<1x2048xf32>
    %c0_2 = arith.constant 0 : index
    %c0_3 = arith.constant 0 : index
    %5 = vector.load %arg2[%c0_2, %c0_3] : memref<1x2048xf32, #tpu.memory_space<vmem>>, vector<1x2048xf32>
    tpu.vector_store %arg2[%c0_2, %c0_3], %4 {strides = array<i32>} : memref<1x2048xf32, #tpu.memory_space<vmem>>, vector<1x2048xf32>,
    return
  }
  func.func @transform_0(%arg0: i32) -> (i32, i32) {
    %c0_i32 = arith.constant 0 : i32
    %c0_i32_0 = arith.constant 0 : i32
    return %arg0, %c0_i32 : i32, i32
  }
  func.func @transform_1(%arg0: i32) -> (i32, i32) {
    %c0_i32 = arith.constant 0 : i32
    %c0_i32_0 = arith.constant 0 : i32
    return %arg0, %c0_i32 : i32, i32
  }
}

</mosaic_0001>

<llo_original>
// kernel: tpu_custom_call.1
$region0: #{tpu_custom_call.1}
  #allocation0 [shape = 'u32[]', space=smem, size = 0x4, offset = 0x4, fixed_abs, tag = 'smem constant byte address 0x4 - core index']
  #allocation1 [shape = 'u32[144,128]{1,0:T(1,128)}', space=vmem, size = 0x12000, scoped, tag = 'internal scratch']
  %s0 = inlined_call_operand.hbm [shape: f32[1,2048], index: 0, kind: input, shape index: {}]
  %s1 = inlined_call_operand.hbm [shape: f32[1,2048], index: 1, kind: output, shape index: {}]
  %s2 = sld [smem:[#allocation0]]
  $region18: #{tpu_custom_call.1} parent=0
    _
  %s4 = ssub.s32 1, %s2
  %s5 = scalar_select 0, %s4, %s2
  $region1: #{tpu_custom_call.1} parent=0
    #allocation2 [shape = 'u8[8192]{0}', space=vmem, size = 0x2000, scoped, tag = 'input window, operand 0, single buffered']
    #allocation3 [shape = 's32[1]{0}', space=sflag, size = 0x4, scoped, tag = 'scoped memory for tpu_custom_call.1']
    #allocation4 [shape = 's32[1]{0}', space=sflag, size = 0x4, scoped, tag = 'scoped memory for tpu_custom_call.1']
    #allocation5 [shape = 'u8[8192]{0}', space=vmem, size = 0x2000, scoped, tag = 'output window, operand 0, single buffered']
    %6 = vsyncpa [#allocation3], 0
    %7 = vsyncpa [#allocation4], 0
    // Predicated region
    $region2: #{tpu_custom_call.1} parent=1 // pred_check
      _
    $region3: #{tpu_custom_call.1} parent=1 // pred_check_branch
      %9 = sbr.rel (0) target = $region5
    $region4: #{tpu_custom_call.1} parent=1 // pred_region
      %s11 = ssub.s32 256, 256
      %12 = vsyncadd [#allocation3], %s11
      %s14 = sshll.u32 [#allocation2], 4
      %s15 = int_to_ptr.vmem [resolvable:$true] %s14
      %17 = dma.hbm_to_vmem [thread:$0]  %s0, 256, %s15, [#allocation3]
    $region5: #{tpu_custom_call.1} parent=1 // pred_fallthru
      _
    // Predicated region
    $region6: #{tpu_custom_call.1} parent=1 // pred_check
      _
    $region7: #{tpu_custom_call.1} parent=1 // pred_check_branch
      %19 = sbr.rel (0) target = $region9
    $region8: #{tpu_custom_call.1} parent=1 // pred_region
      %20 = dma.done [#allocation3], 256
    $region9: #{tpu_custom_call.1} parent=1 // pred_fallthru
      _
    %v21 = vld [vmem:[#allocation2] sm:$0xff]
    %v22 = vld [vmem:[#allocation2 + $0x8] sm:$0xff]
    %v23 = vmax.f32 %v21, 0.0
    %v24 = vmax.f32 %v22, 0.0
    %v25 = vmin.f32 %v23, 6.0
    %v26 = vmin.f32 %v24, 6.0
    %27 = vst [vmem:[#allocation5] sm:$0xff] %v25
    %28 = vst [vmem:[#allocation5 + $0x8] sm:$0xff] %v26
    // Predicated region
    $region10: #{tpu_custom_call.1} parent=1 // pred_check
      _
    $region11: #{tpu_custom_call.1} parent=1 // pred_check_branch
      %30 = sbr.rel (0) target = $region13
    $region12: #{tpu_custom_call.1} parent=1 // pred_region
      %s32 = ssub.s32 256, 256
      %33 = vsyncadd [#allocation4], %s32
      %s35 = sshll.u32 [#allocation5], 4
      %s36 = int_to_ptr.vmem [resolvable:$true] %s35
      %38 = dma.vmem_to_hbm [thread:$0]  %s36, 256, %s1, [#allocation4]
    $region13: #{tpu_custom_call.1} parent=1 // pred_fallthru
      _
    // Predicated region
    $region14: #{tpu_custom_call.1} parent=1 // pred_check
      _
    $region15: #{tpu_custom_call.1} parent=1 // pred_check_branch
      %40 = sbr.rel (0) target = $region17
    $region16: #{tpu_custom_call.1} parent=1 // pred_region
      %41 = dma.done [#allocation4], 256
    $region17: #{tpu_custom_call.1} parent=1 // pred_fallthru
      _
    %42 = vsyncpa [#allocation3], 1
    %43 = vsyncpa [#allocation4], 1

</llo_original>
